<compile_context>
chip_gen: v6e
topology: v6e:2x2x1
jax: 0.10.0
libtpu: 0.0.40
codegen_flags: <defaults>
</compile_context>

<pallas_src>
import jax
import jax.numpy as jnp
from jax.experimental import pallas as pl
from jax.experimental.pallas import tpu as pltpu

_EPS = 1e-9
_LANE = 128
_SUBLANE = 8
_MAX_BLOCK_ROWS = 1024  # 1024x128 f32 = 512 KiB per input per pipeline buffer


def _bpr_kernel(n_ref, pos_ref, neg_ref, out_ref):
    # n_ref: SMEM scalar-prefetch ref holding the true (unpadded) element count.
    # pos_ref/neg_ref: (block_rows, 128) VMEM tiles (native dtype).
    # out_ref: (1, 1, 128) per-block lane-wise partial sums.
    block_rows, lanes = pos_ref.shape
    i = pl.program_id(0)

    pos = pos_ref[...].astype(jnp.float32)
    neg = neg_ref[...].astype(jnp.float32)
    # Keep sigmoid + eps + log to bit-track the PyTorch reference semantics.
    loss = -jnp.log(jax.nn.sigmoid(pos - neg) + jnp.float32(_EPS))

    # In-kernel validity mask: global flat index < n.
    row_idx = jax.lax.broadcasted_iota(jnp.int32, (block_rows, lanes), 0)
    lane_idx = jax.lax.broadcasted_iota(jnp.int32, (block_rows, lanes), 1)
    gidx = (i * block_rows + row_idx) * lanes + lane_idx
    masked = jnp.where(gidx < n_ref[0], loss, jnp.float32(0.0))

    # Per-block lane-wise partial sum (sublane reduction); full reduction of the
    # tiny partial tensor happens in the wrapper.
    out_ref[...] = jnp.sum(masked, axis=0, keepdims=True)[None, :, :]


def bpr_loss(pos_scores, neg_scores, *, max_block_rows=_MAX_BLOCK_ROWS):
    """Pallas implementation of BPRLoss.forward(pos_scores, neg_scores)."""
    pos_f = pos_scores.reshape(-1)
    neg_f = neg_scores.reshape(-1)
    n = pos_f.shape[0]
    if n == 0:
        # torch mean over an empty tensor is NaN.
        return jnp.float32(jnp.nan)

    rows = pl.cdiv(n, _LANE)
    block_rows = min(max_block_rows, pl.cdiv(rows, _SUBLANE) * _SUBLANE)
    num_blocks = pl.cdiv(rows, block_rows)
    padded_rows = num_blocks * block_rows
    pad = padded_rows * _LANE - n

    # Pad in the *native* dtype (no wrapper-side upcast) and view as (rows, 128).
    pos_p = jnp.pad(pos_f, (0, pad)).reshape(padded_rows, _LANE)
    neg_p = jnp.pad(neg_f, (0, pad)).reshape(padded_rows, _LANE)
    n_arr = jnp.array([n], dtype=jnp.int32)

    partials = pl.pallas_call(
        _bpr_kernel,
        out_shape=jax.ShapeDtypeStruct((num_blocks, 1, _LANE), jnp.float32),
        grid_spec=pltpu.PrefetchScalarGridSpec(
            num_scalar_prefetch=1,
            grid=(num_blocks,),
            in_specs=[
                pl.BlockSpec((block_rows, _LANE), lambda i, n_ref: (i, 0)),
                pl.BlockSpec((block_rows, _LANE), lambda i, n_ref: (i, 0)),
            ],
            out_specs=pl.BlockSpec((1, 1, _LANE), lambda i, n_ref: (i, 0, 0)),
        ),
        compiler_params=pltpu.CompilerParams(
            # Independent partial sums per block -> parallel grid axis
            # (shards across both TensorCores on v7x).
            dimension_semantics=("parallel",),
        ),
    )(n_arr, pos_p, neg_p)

    # Glue: mean = sum(partials) / N  (tiny reduction, done by XLA).
    return (jnp.sum(partials) / jnp.float32(n)).astype(jnp.float32)


def _bpr_loss_ref(pos_scores, neg_scores):
    p = pos_scores.astype(jnp.float32)
    q = neg_scores.astype(jnp.float32)
    return -jnp.log(jax.nn.sigmoid(p - q) + _EPS).mean()


if __name__ == "__main__":
    key = jax.random.PRNGKey(0)
    k_pos, k_neg = jax.random.split(key)

    # Case 1: small batch, not a multiple of 8*128 -> exercises in-kernel mask.
    batch = 200
    pos_scores = jax.random.normal(k_pos, (batch,), dtype=jnp.float32)
    neg_scores = jax.random.normal(k_neg, (batch,), dtype=jnp.float32)
    out = jax.block_until_ready(bpr_loss(pos_scores, neg_scores))
    ref = _bpr_loss_ref(pos_scores, neg_scores)
    assert jnp.allclose(out, ref, rtol=1e-5, atol=1e-6), (out, ref)

    # Case 2: force multiple grid blocks (small block_rows) + ragged tail.
    batch2 = 3000
    k1, k2 = jax.random.split(jax.random.PRNGKey(1))
    pos2 = jax.random.normal(k1, (batch2,), dtype=jnp.float32)
    neg2 = jax.random.normal(k2, (batch2,), dtype=jnp.float32)
    out2 = jax.block_until_ready(bpr_loss(pos2, neg2, max_block_rows=8))
    ref2 = _bpr_loss_ref(pos2, neg2)
    assert jnp.allclose(out2, ref2, rtol=1e-5, atol=1e-6), (out2, ref2)

    print("KERNEL_OK")
</pallas_src>

<mosaic_0001>
module attributes {stable_mosaic.version = 11 : i64} {
  func.func @_bpr_kernel(%arg0: i32, %arg1: memref<1xi32, #tpu.memory_space<smem>>, %arg2: memref<8x128xf32, #tpu.memory_space<vmem>>, %arg3: memref<8x128xf32, #tpu.memory_space<vmem>>, %arg4: memref<1x1x128xf32, #tpu.memory_space<vmem>>) attributes {dimension_semantics = [#tpu.dimension_semantics<parallel>], iteration_bounds = array<i64: 1>, scalar_prefetch = 1 : i64, scratch_operands = 0 : i64, tpu.core_type = #tpu.core_type<tc>, window_params = [{transform_indices = @transform_0, window_bounds = array<i64: 8, 128>}, {transform_indices = @transform_1, window_bounds = array<i64: 8, 128>}, {transform_indices = @transform_2, window_bounds = array<i64: 1, 1, 128>}]} {
    %c0 = arith.constant 0 : index
    %c0_0 = arith.constant 0 : index
    %0 = vector.load %arg2[%c0, %c0_0] : memref<8x128xf32, #tpu.memory_space<vmem>>, vector<8x128xf32>
    %c0_1 = arith.constant 0 : index
    %c0_2 = arith.constant 0 : index
    %1 = vector.load %arg3[%c0_1, %c0_2] : memref<8x128xf32, #tpu.memory_space<vmem>>, vector<8x128xf32>
    %2 = arith.subf %0, %1 : vector<8x128xf32>
    %3 = arith.negf %2 : vector<8x128xf32>
    %4 = math.exp %3 : vector<8x128xf32>
    %cst = arith.constant 1.000000e+00 : f32
    %5 = vector.broadcast %cst : f32 to vector<8x128xf32>
    %6 = arith.addf %5, %4 : vector<8x128xf32>
    %7 = arith.divf %5, %6 : vector<8x128xf32>
    %cst_3 = arith.constant 9.99999971E-10 : f32
    %8 = vector.broadcast %cst_3 : f32 to vector<8x128xf32>
    %9 = arith.addf %7, %8 : vector<8x128xf32>
    %10 = math.log %9 : vector<8x128xf32>
    %cst_4 = arith.constant 0.000000e+00 : f32
    %11 = vector.broadcast %cst_4 : f32 to vector<8x128xf32>
    %12 = arith.subf %11, %10 : vector<8x128xf32>
    %13 = tpu.iota {dimensions = array<i32: 0>} : vector<8x128xi32>
    %14 = tpu.iota {dimensions = array<i32: 1>} : vector<8x128xi32>
    %c8_i32 = arith.constant 8 : i32
    %15 = arith.muli %arg0, %c8_i32 : i32
    %16 = vector.broadcast %15 : i32 to vector<8x128xi32>
    %17 = arith.addi %16, %13 : vector<8x128xi32>
    %c128_i32 = arith.constant 128 : i32
    %18 = vector.broadcast %c128_i32 : i32 to vector<8x128xi32>
    %19 = arith.muli %17, %18 : vector<8x128xi32>
    %20 = arith.addi %19, %14 : vector<8x128xi32>
    %c0_5 = arith.constant 0 : index
    %21 = memref.load %arg1[%c0_5] : memref<1xi32, #tpu.memory_space<smem>>
    %22 = vector.broadcast %21 : i32 to vector<8x128xi32>
    %23 = arith.cmpi slt, %20, %22 : vector<8x128xi32>
    %cst_6 = arith.constant 0.000000e+00 : f32
    %24 = vector.broadcast %cst_6 : f32 to vector<8x128xf32>
    %25 = arith.select %23, %12, %24 : vector<8x128xi1>, vector<8x128xf32>
    %cst_7 = arith.constant dense<0.000000e+00> : vector<128xf32>
    %26 = vector.multi_reduction <add>, %25, %cst_7 [0] : vector<8x128xf32> to vector<128xf32>
    %27 = vector.shape_cast %26 : vector<128xf32> to vector<1x128xf32>
    %28 = vector.shape_cast %27 : vector<1x128xf32> to vector<1x1x128xf32>
    %c0_8 = arith.constant 0 : index
    %c0_9 = arith.constant 0 : index
    %c0_10 = arith.constant 0 : index
    %29 = vector.load %arg4[%c0_8, %c0_9, %c0_10] : memref<1x1x128xf32, #tpu.memory_space<vmem>>, vector<1x1x128xf32>
    tpu.vector_store %arg4[%c0_8, %c0_9, %c0_10], %28 {strides = array<i32>} : memref<1x1x128xf32, #tpu.memory_space<vmem>>, vector<1x1x128xf32>,
    return
  }
  func.func @transform_0(%arg0: i32, %arg1: memref<1xi32, #tpu.memory_space<smem>>) -> (i32, i32) {
    %c0_i32 = arith.constant 0 : i32
    %c0_i32_0 = arith.constant 0 : i32
    return %arg0, %c0_i32 : i32, i32
  }
  func.func @transform_1(%arg0: i32, %arg1: memref<1xi32, #tpu.memory_space<smem>>) -> (i32, i32) {
    %c0_i32 = arith.constant 0 : i32
    %c0_i32_0 = arith.constant 0 : i32
    return %arg0, %c0_i32 : i32, i32
  }
  func.func @transform_2(%arg0: i32, %arg1: memref<1xi32, #tpu.memory_space<smem>>) -> (i32, i32, i32) {
    %c0_i32 = arith.constant 0 : i32
    %c0_i32_0 = arith.constant 0 : i32
    %c0_i32_1 = arith.constant 0 : i32
    return %arg0, %c0_i32, %c0_i32_0 : i32, i32, i32
  }
}

</mosaic_0001>

<llo_original>
// kernel: tpu_custom_call.1
$region0: #{tpu_custom_call.1}
  #allocation0 [shape = 'u32[]', space=smem, size = 0x4, offset = 0x4, fixed_abs, tag = 'smem constant byte address 0x4 - core index']
  #allocation1 [shape = 'u32[144,128]{1,0:T(1,128)}', space=vmem, size = 0x12000, scoped, tag = 'internal scratch']
  #allocation2 [shape = 's32[1]{0}', space=sflag, size = 0x4, scoped, tag = 'scoped memory for tpu_custom_call.1']
  #allocation3 [shape = 's32[1]{0:T(128)S(6)}', space=smem, size = 0x200, scoped, tag = 'prefetched SMEM operand 0']
  %s0 = inlined_call_operand.<no memory space> [shape: s32[1], index: 0, kind: input, shape index: {}]
  %s1 = inlined_call_operand.hbm [shape: f32[8,128], index: 1, kind: input, shape index: {}]
  %s2 = inlined_call_operand.hbm [shape: f32[8,128], index: 2, kind: input, shape index: {}]
  %s3 = inlined_call_operand.hbm [shape: f32[1,1,128], index: 3, kind: output, shape index: {}]
  %s4 = sld [smem:[#allocation0]]
  $region26: #{tpu_custom_call.1} parent=0
    _
  %s6 = ssub.s32 1, %s4
  %s7 = scalar_select 0, %s6, %s4
  %8 = sst [smem:[#allocation3]] %s0
  $region1: #{tpu_custom_call.1} parent=0
    #allocation4 [shape = 'u8[4096]{0}', space=vmem, size = 0x1000, scoped, tag = 'input window, operand 1, single buffered']
    #allocation5 [shape = 's32[1]{0}', space=sflag, size = 0x4, scoped, tag = 'scoped memory for tpu_custom_call.1']
    #allocation6 [shape = 's32[1]{0}', space=sflag, size = 0x4, scoped, tag = 'scoped memory for tpu_custom_call.1']
    #allocation7 [shape = 'u8[4096]{0}', space=vmem, size = 0x1000, scoped, tag = 'input window, operand 2, single buffered']
    #allocation8 [shape = 's32[1]{0}', space=sflag, size = 0x4, scoped, tag = 'scoped memory for tpu_custom_call.1']
    #allocation9 [shape = 'u8[512]{0}', space=vmem, size = 0x400, scoped, tag = 'output window, operand 0, single buffered']
    %9 = vsyncpa [#allocation5], 0
    %10 = vsyncpa [#allocation8], 0
    %11 = vsyncpa [#allocation6], 0
    // Predicated region
    $region2: #{tpu_custom_call.1} parent=1 // pred_check
      _
    $region3: #{tpu_custom_call.1} parent=1 // pred_check_branch
      %13 = sbr.rel (0) target = $region5
    $region4: #{tpu_custom_call.1} parent=1 // pred_region
      %s15 = ssub.s32 128, 128
      %16 = vsyncadd [#allocation5], %s15
      %s18 = sshll.u32 [#allocation4], 4
      %s19 = int_to_ptr.vmem [resolvable:$true] %s18
      %21 = dma.hbm_to_vmem [thread:$0]  %s1, 128, %s19, [#allocation5]
    $region5: #{tpu_custom_call.1} parent=1 // pred_fallthru
      _
    // Predicated region
    $region6: #{tpu_custom_call.1} parent=1 // pred_check
      _
    $region7: #{tpu_custom_call.1} parent=1 // pred_check_branch
      %23 = sbr.rel (0) target = $region9
    $region8: #{tpu_custom_call.1} parent=1 // pred_region
      %s25 = ssub.s32 128, 128
      %26 = vsyncadd [#allocation8], %s25
      %s28 = sshll.u32 [#allocation7], 4
      %s29 = int_to_ptr.vmem [resolvable:$true] %s28
      %31 = dma.hbm_to_vmem [thread:$0]  %s2, 128, %s29, [#allocation8]
    $region9: #{tpu_custom_call.1} parent=1 // pred_fallthru
      _
    // Predicated region
    $region10: #{tpu_custom_call.1} parent=1 // pred_check
      _
    $region11: #{tpu_custom_call.1} parent=1 // pred_check_branch
      %33 = sbr.rel (0) target = $region13
    $region12: #{tpu_custom_call.1} parent=1 // pred_region
      %34 = dma.done [#allocation5], 128
    $region13: #{tpu_custom_call.1} parent=1 // pred_fallthru
      _
    // Predicated region
    $region14: #{tpu_custom_call.1} parent=1 // pred_check
      _
    $region15: #{tpu_custom_call.1} parent=1 // pred_check_branch
      %36 = sbr.rel (0) target = $region17
    $region16: #{tpu_custom_call.1} parent=1 // pred_region
      %37 = dma.done [#allocation8], 128
    $region17: #{tpu_custom_call.1} parent=1 // pred_fallthru
      _
    %v38 = vld [vmem:[#allocation4] sm:$0xff]
    %v39 = vld [vmem:[#allocation7] sm:$0xff]
    %v40 = vsub.f32 %v38, %v39
    %v41 = vxor.u32 %v40, 2147483648
    %v42 = vmul.f32 %v41, 1.442695
    %v43 = vpow.pop %v42
    %v44 = vadd.f32 %v43, 1.0
    %v45 = vrcp.pop %v44
    %v46 = vmul.f32 1.0, %v45
    %v47 = vadd.f32 %v46, 1e-09
    %v48 = vlog2.pop %v47
    %v49 = vmul.f32 %v48, 0.6931472
    %v50 = vsub.f32 0.0, %v49
    %v51 = vlaneseq
    %v52 = vshrl.u32 %v51, 7
    %v53 = vlaneseq
    %v54 = vand.u32 %v53, 127
    %s55 = smul.u32 0, 8
    %v56 = vstv %s55
    %v57 = vadd.s32 %v56, %v52
    %v58 = vmul.u32 %v57, 128
    %v59 = vadd.s32 %v58, %v54
    %s60 = sld [smem:[#allocation3]]
    %v61 = vstv %s60
    %vm62 = vcmp.lt.s32.totalorder %v59, %v61
    %v63 = vsel %vm62, %v50, 0.0
    %v64 = vrot.slane %v63, 4
    %v65 = vadd.f32 %v63, %v64
    %v66 = vrot.slane %v65, 2
    %v67 = vadd.f32 %v65, %v66
    %v68 = vrot.slane %v67, 1
    %v69 = vadd.f32 %v67, %v68
    %70 = vst [vmem:[#allocation9] sm:$0x1] %v69
    // Predicated region
    $region18: #{tpu_custom_call.1} parent=1 // pred_check
      _
    $region19: #{tpu_custom_call.1} parent=1 // pred_check_branch
      %72 = sbr.rel (0) target = $region21
    $region20: #{tpu_custom_call.1} parent=1 // pred_region
      %s74 = ssub.s32 16, 16
      %75 = vsyncadd [#allocation6], %s74
      %s77 = sshll.u32 [#allocation9], 4
      %s78 = int_to_ptr.vmem [resolvable:$true] %s77
      %80 = dma.vmem_to_hbm [thread:$0]  %s78, 16, %s3, [#allocation6]
    $region21: #{tpu_custom_call.1} parent=1 // pred_fallthru
      _
    // Predicated region
    $region22: #{tpu_custom_call.1} parent=1 // pred_check
      _
    $region23: #{tpu_custom_call.1} parent=1 // pred_check_branch
      %82 = sbr.rel (0) target = $region25
    $region24: #{tpu_custom_call.1} parent=1 // pred_region
      %83 = dma.done [#allocation6], 16
    $region25: #{tpu_custom_call.1} parent=1 // pred_fallthru
      _
    %84 = vsyncpa [#allocation5], 1
    %85 = vsyncpa [#allocation8], 1
    %86 = vsyncpa [#allocation6], 1

</llo_original>
